<compile_context>
chip_gen: v5e
topology: v5e:2x2
jax: 0.10.0
libtpu: 0.0.40
codegen_flags: <defaults>
</compile_context>

<pallas_src>
import functools

import jax
import jax.numpy as jnp
from jax import lax
from jax.experimental import pallas as pl
from jax.experimental.pallas import tpu as pltpu


def _round_up(a: int, b: int) -> int:
    return (a + b - 1) // b * b


def _cdiv(a: int, b: int) -> int:
    return (a + b - 1) // b


def _vmem_capacity_bytes() -> int:
    try:
        info = pltpu.get_tpu_info()
        cap = getattr(info, "vmem_capacity_bytes", None)
        if cap:
            return int(cap)
    except Exception:
        pass
    return 64 * 1024 * 1024  # conservative: v7x per-TensorCore VMEM


def _fc_relu_single_k_kernel(x_ref, w_ref, b_ref, o_ref):
    """Single K step: out tile = relu(x_tile @ w_tile.T + b). No scratch."""
    acc = lax.dot_general(
        x_ref[...], w_ref[...],
        dimension_numbers=(((1,), (1,)), ((), ())),
        preferred_element_type=jnp.float32)
    o_ref[...] = jnp.maximum(
        acc + b_ref[...].astype(jnp.float32), 0.0).astype(o_ref.dtype)


def _fc_relu_multi_k_kernel(x_ref, w_ref, b_ref, o_ref, acc_ref, *,
                            dim_in, tk, mask_tail):
    """K-tiled path with f32 accumulator; bias+ReLU epilogue on the last step."""
    k = pl.program_id(2)

    @pl.when(k == 0)
    def _():
        acc_ref[...] = jnp.zeros_like(acc_ref)

    x = x_ref[...]
    w = w_ref[...]
    if mask_tail:
        # Zero the K tail of the (possibly OOB) boundary block in-kernel
        # instead of padding activations/weights in HBM.
        base = k * tk
        col_x = lax.broadcasted_iota(jnp.int32, x.shape, 1) + base
        x = jnp.where(col_x < dim_in, x, jnp.zeros_like(x))
        col_w = lax.broadcasted_iota(jnp.int32, w.shape, 1) + base
        w = jnp.where(col_w < dim_in, w, jnp.zeros_like(w))

    acc_ref[...] += lax.dot_general(
        x, w, dimension_numbers=(((1,), (1,)), ((), ())),
        preferred_element_type=jnp.float32)

    @pl.when(k == pl.num_programs(2) - 1)
    def _():
        o_ref[...] = jnp.maximum(
            acc_ref[...] + b_ref[...].astype(jnp.float32), 0.0
        ).astype(o_ref.dtype)


@functools.partial(
    jax.jit, static_argnames=("tm_target", "tn_target", "tk_target"))
def fully_connected_block(x, weight, bias, *,
                          tm_target=512, tn_target=512, tk_target=1024):
    """Pallas equivalent of FullyConnectedBlock(dim_in, dim_out).forward(x).

    x:      [..., dim_in]
    weight: [dim_out, dim_in]   (native PyTorch nn.Linear layout, no transpose)
    bias:   [dim_out]
    returns [..., dim_out]
    """
    dim_out, dim_in = weight.shape
    lead_shape = x.shape[:-1]
    m = 1
    for d in lead_shape:
        m *= d
    m = max(m, 1)
    x2d = x.reshape(m, dim_in)
    b2d = bias.reshape(1, dim_out)

    isize = jnp.dtype(x.dtype).itemsize
    wsize = jnp.dtype(weight.dtype).itemsize
    bsize = jnp.dtype(bias.dtype).itemsize
    osize = isize
    sub = 8 if isize >= 4 else 16

    cap = _vmem_capacity_bytes()
    budget = min(int(cap * 0.7), 100 * 1024 * 1024)

    # ---- M tiling (keep >= 2 blocks so both v7x TensorCores get work) ------
    if m >= 2 * sub:
        tm_cap = _round_up(_cdiv(m, 2), sub)
    else:
        tm_cap = _round_up(m, sub)
    tm = min(_round_up(tm_target, sub), tm_cap)

    # ---- N / K tiling -------------------------------------------------------
    w_total = dim_out * dim_in * wsize
    weight_resident = (2 * w_total) <= max(budget // 3, 1)

    if weight_resident:
        # Whole weight + bias live in VMEM; fetched from HBM exactly once.
        tn = dim_out
        tk = dim_in
    else:
        tn = min(_round_up(tn_target, 128), _round_up(dim_out, 128))
        if dim_in <= tk_target:
            tk = dim_in
        else:
            tk = max((tk_target // 128) * 128, 128)
            # Prefer a tk that divides dim_in so no in-kernel tail masking.
            for cand in range(tk, 127, -128):
                if dim_in % cand == 0:
                    tk = cand
                    break
    k_steps = _cdiv(dim_in, tk)

    def working_set(tm_, tn_, tk_):
        xb = tm_ * tk_ * isize
        wb = tn_ * tk_ * wsize
        bb = tn_ * bsize
        ob = tm_ * tn_ * osize
        acc = tm_ * tn_ * 4 if k_steps > 1 else 0
        return 2 * (xb + wb + bb + ob) + acc

    # Shrink tiles until the double-buffered working set fits the VMEM budget.
    while working_set(tm, tn, tk) > budget and tm > sub:
        tm = _round_up(max(tm // 2, sub), sub)
    while working_set(tm, tn, tk) > budget and tn > 128 and tn % 128 == 0:
        tn = max((tn // 2) // 128 * 128, 128)
    while working_set(tm, tn, tk) > budget and k_steps > 1 and tk > 128:
        tk = max((tk // 2) // 128 * 128, 128)
        k_steps = _cdiv(dim_in, tk)

    m_blocks = _cdiv(m, tm)
    n_blocks = _cdiv(dim_out, tn)
    single_k = (k_steps == 1)

    # ---- cost estimate: real HBM traffic incl. re-streaming factors --------
    x_traffic = m * dim_in * isize * n_blocks
    w_reuse = 1 if (n_blocks == 1 and k_steps == 1) else m_blocks
    w_traffic = dim_out * dim_in * wsize * w_reuse
    bytes_accessed = x_traffic + w_traffic + dim_out * bsize + m * dim_out * osize
    cost = pl.CostEstimate(
        flops=2 * m * dim_in * dim_out,
        transcendentals=0,
        bytes_accessed=int(bytes_accessed))

    vmem_limit = int(min(budget, max(32 * 1024 * 1024,
                                     2 * working_set(tm, tn, tk))))

    if single_k:
        kernel = _fc_relu_single_k_kernel
        grid = (m_blocks, n_blocks)
        in_specs = [
            pl.BlockSpec((tm, tk), lambda i, j: (i, 0)),   # x rows
            pl.BlockSpec((tn, tk), lambda i, j: (j, 0)),   # weight (native layout)
            pl.BlockSpec((1, tn), lambda i, j: (0, j)),    # bias
        ]
        out_specs = pl.BlockSpec((tm, tn), lambda i, j: (i, j))
        scratch_shapes = []
        dims = ("parallel", "parallel")
    else:
        kernel = functools.partial(
            _fc_relu_multi_k_kernel,
            dim_in=dim_in, tk=tk, mask_tail=(dim_in % tk != 0))
        grid = (m_blocks, n_blocks, k_steps)
        in_specs = [
            pl.BlockSpec((tm, tk), lambda i, j, k: (i, k)),
            pl.BlockSpec((tn, tk), lambda i, j, k: (j, k)),
            pl.BlockSpec((1, tn), lambda i, j, k: (0, j)),
        ]
        out_specs = pl.BlockSpec((tm, tn), lambda i, j, k: (i, j))
        scratch_shapes = [pltpu.VMEM((tm, tn), jnp.float32)]
        dims = ("parallel", "parallel", "arbitrary")

    out = pl.pallas_call(
        kernel,
        out_shape=jax.ShapeDtypeStruct((m, dim_out), x.dtype),
        grid_spec=pltpu.PrefetchScalarGridSpec(
            num_scalar_prefetch=0,
            grid=grid,
            in_specs=in_specs,
            out_specs=out_specs,
            scratch_shapes=scratch_shapes),
        compiler_params=pltpu.CompilerParams(
            dimension_semantics=dims,
            vmem_limit_bytes=vmem_limit),
        cost_estimate=cost,
    )(x2d, weight, b2d)

    # TODO(synk): only ReLU / bias=True (the module defaults) are implemented;
    # other activation choices would need a different epilogue.
    return out.reshape(*lead_shape, dim_out)


if __name__ == "__main__":
    # Small shapes consistent with the module: input [batch, seq, dim_in].
    batch, seq, dim_in, dim_out = 2, 8, 32, 64

    key = jax.random.PRNGKey(0)
    kx, kw, kb = jax.random.split(key, 3)

    x = jax.random.normal(kx, (batch, seq, dim_in), dtype=jnp.float32)
    bound = 1.0 / jnp.sqrt(jnp.float32(dim_in))
    weight = jax.random.uniform(kw, (dim_out, dim_in), jnp.float32, -bound, bound)
    bias = jax.random.uniform(kb, (dim_out,), jnp.float32, -bound, bound)

    out = fully_connected_block(x, weight, bias)
    out = jax.block_until_ready(out)

    # Reference check in plain JAX (same math as torch: relu(x @ W.T + b)).
    ref = jnp.maximum(jnp.einsum("bsd,od->bso", x, weight) + bias, 0.0)
    assert out.shape == (batch, seq, dim_out)
    assert jnp.allclose(out, ref, atol=1e-5, rtol=1e-5)

    print("KERNEL_OK")
</pallas_src>

<mosaic_0001>
module attributes {stable_mosaic.version = 11 : i64} {
  func.func @_fc_relu_single_k_kernel(%arg0: i32, %arg1: i32, %arg2: memref<8x32xf32, #tpu.memory_space<vmem>>, %arg3: memref<64x32xf32, #tpu.memory_space<vmem>>, %arg4: memref<1x64xf32, #tpu.memory_space<vmem>>, %arg5: memref<8x64xf32, #tpu.memory_space<vmem>>) attributes {dimension_semantics = [#tpu.dimension_semantics<parallel>, #tpu.dimension_semantics<parallel>], iteration_bounds = array<i64: 2, 1>, scalar_prefetch = 0 : i64, scratch_operands = 0 : i64, tpu.core_type = #tpu.core_type<tc>, window_params = [{transform_indices = @transform_0, window_bounds = array<i64: 8, 32>}, {transform_indices = @transform_1, window_bounds = array<i64: 64, 32>}, {transform_indices = @transform_2, window_bounds = array<i64: 1, 64>}, {transform_indices = @transform_3, window_bounds = array<i64: 8, 64>}]} {
    %c0 = arith.constant 0 : index
    %c0_0 = arith.constant 0 : index
    %0 = vector.load %arg2[%c0, %c0_0] : memref<8x32xf32, #tpu.memory_space<vmem>>, vector<8x32xf32>
    %c0_1 = arith.constant 0 : index
    %c0_2 = arith.constant 0 : index
    %1 = vector.load %arg3[%c0_1, %c0_2] : memref<64x32xf32, #tpu.memory_space<vmem>>, vector<64x32xf32>
    %cst = arith.constant dense<0.000000e+00> : vector<8x64xf32>
    %2 = tpu.matmul %0, %1, %cst {dimension_numbers = #tpu.dot_dimension_numbers<[1], [1], [0], [0], [0, 0, 1, 0], [], []>} : vector<8x32xf32>, vector<64x32xf32>, vector<8x64xf32> -> vector<8x64xf32>
    %c0_3 = arith.constant 0 : index
    %c0_4 = arith.constant 0 : index
    %3 = vector.load %arg4[%c0_3, %c0_4] : memref<1x64xf32, #tpu.memory_space<vmem>>, vector<1x64xf32>
    %4 = vector.broadcast %3 : vector<1x64xf32> to vector<8x64xf32>
    %5 = arith.addf %2, %4 : vector<8x64xf32>
    %cst_5 = arith.constant 0.000000e+00 : f32
    %6 = vector.broadcast %cst_5 : f32 to vector<8x64xf32>
    %7 = arith.maximumf %5, %6 : vector<8x64xf32>
    %c0_6 = arith.constant 0 : index
    %c0_7 = arith.constant 0 : index
    %8 = vector.load %arg5[%c0_6, %c0_7] : memref<8x64xf32, #tpu.memory_space<vmem>>, vector<8x64xf32>
    tpu.vector_store %arg5[%c0_6, %c0_7], %7 {strides = array<i32>} : memref<8x64xf32, #tpu.memory_space<vmem>>, vector<8x64xf32>,
    return
  }
  func.func @transform_0(%arg0: i32, %arg1: i32) -> (i32, i32) {
    %c0_i32 = arith.constant 0 : i32
    %c0_i32_0 = arith.constant 0 : i32
    return %arg0, %c0_i32 : i32, i32
  }
  func.func @transform_1(%arg0: i32, %arg1: i32) -> (i32, i32) {
    %c0_i32 = arith.constant 0 : i32
    %c0_i32_0 = arith.constant 0 : i32
    return %arg1, %c0_i32 : i32, i32
  }
  func.func @transform_2(%arg0: i32, %arg1: i32) -> (i32, i32) {
    %c0_i32 = arith.constant 0 : i32
    %c0_i32_0 = arith.constant 0 : i32
    return %c0_i32, %arg1 : i32, i32
  }
  func.func @transform_3(%arg0: i32, %arg1: i32) -> (i32, i32) {
    %c0_i32 = arith.constant 0 : i32
    return %arg0, %arg1 : i32, i32
  }
}

</mosaic_0001>

<llo_original>
// kernel: fully_connected_block.1
$region0: #{fully_connected_block.1}
  #allocation0 [shape = 'u32[]', space=smem, size = 0x4, offset = 0x4, fixed_abs, tag = 'smem constant byte address 0x4 - core index']
  #allocation1 [shape = 'u32[72,128]{1,0:T(1,128)}', space=vmem, size = 0x9000, scoped, tag = 'internal scratch']
  %s0 = inlined_call_operand.vmem [shape: f32[16,32], index: 0, kind: input, shape index: {}]
  %s1 = inlined_call_operand.vmem [shape: f32[64,32], index: 1, kind: input, shape index: {}]
  %s2 = inlined_call_operand.vmem [shape: f32[1,64], index: 2, kind: input, shape index: {}]
  %s3 = inlined_call_operand.hbm [shape: f32[16,64], index: 3, kind: output, shape index: {}]
  %s4 = sld [smem:[#allocation0]]
  $region45: #{fully_connected_block.1} parent=0
    _
  %s6 = ssub.s32 1, %s4
  %s7 = scalar_select 0, %s6, %s4
  $region1: #{fully_connected_block.1} parent=0
    #allocation2 [shape = 'u8[8192]{0}', space=vmem, size = 0x2000, scoped, tag = 'output window, operand 0']
    #allocation3 [shape = 's32[2]{0}', space=sflag, size = 0x8, scoped, tag = 'scoped memory for fully_connected_block.1']
    %8 = vsyncpa [#allocation3], 0
    %s9 = scalar_lea.sflag [#allocation3], 1
    %10 = vsyncpa %s9, 0
    loop: start=0, step=1, limit=4
    $region2: #{fully_connected_block.1} parent=1 // loop_pre_header
      _
    $region3: #{fully_connected_block.1} parent=1 // loop_header
      %s12 = sphi 0, %s16
      %p13 = scmp.ge.s32.totalorder %s12, 4
      %s19 = sphi 0, %s31
      %s20 = sphi 0, %s27
      %s21 = sphi 0, %s19
      %s22 = sphi 0, %s20
      %s23 = sphi 0, %s21
      %s24 = sphi 0, %s22
      %s34 = sphi 0, %s36
      %s37 = sphi 0, %s34
      %s38 = sphi 0, %s37
      %s54 = sphi 0, %s38
      %s60 = sphi 0, %s62
      %s63 = sphi 0, %s60
      %s64 = sphi 0, %s63
      %s80 = sphi 0, %s64
      %s86 = sphi 0, %s88
      %s89 = sphi 0, %s86
      %s90 = sphi 0, %s89
      %s106 = sphi 0, %s90
      %s114 = sphi 0, %s116
      %s117 = sphi 0, %s114
      %s118 = sphi 0, %s117
      %s134 = sphi 0, %s118
    $region4: #{fully_connected_block.1} parent=1 // loop_header_branch
      %15 = sbr.rel (%p13) target = $region8
    $region5: #{fully_connected_block.1} parent=1 // loop_body
      %s17 = ssub.s32 %s12, 1
      %s18 = ssub.s32 %s12, 2
      %s25 = sadd.s32 1, %s20
      %p26 = scmp.ge.s32.totalorder %s25, 1
      %s27 = scalar_select %p26, 0, %s25
      %s28 = sadd.s32 1, %s19
      %s29 = scalar_select %p26, %s28, %s19
      %p30 = scmp.ge.s32.totalorder %s29, 2
      %s31 = scalar_select %p30, 0, %s29
      %s32 = ssub.s32 %s19, %s31
      %p33 = scmp.eq.s32.totalorder %s32, 0
      %s35 = sadd.s32 %s34, 1
      %s36 = scalar_select %p33, %s34, %s35
      %p39 = pneg %p33
      %p40 = scmp.eq.s32.totalorder %s12, 1
      %p41 = por %p39, %p40
      %p42 = scmp.ne.s32.totalorder %s34, %s37
      %p43 = scmp.eq.s32.totalorder %s12, 0
      %p44 = por %p42, %p43
      %p45 = scmp.ne.s32.totalorder %s34, %s37
      %p46 = scmp.eq.s32.totalorder %s17, 1
      %p47 = por %p45, %p46
      %p48 = scmp.ne.s32.totalorder %s37, %s38
      %p49 = scmp.eq.s32.totalorder %s17, 0
      %p50 = por %p48, %p49
      %p51 = scmp.ne.s32.totalorder %s37, %s38
      %p52 = scmp.eq.s32.totalorder %s18, 1
      %p53 = por %p51, %p52
      %p55 = scmp.ne.s32.totalorder %s38, %s54
      %p56 = scmp.eq.s32.totalorder %s18, 0
      %p57 = por %p55, %p56
      %s58 = ssub.s32 %s20, %s27
      %p59 = scmp.eq.s32.totalorder %s58, 0
      %s61 = sadd.s32 %s60, 1
      %s62 = scalar_select %p59, %s60, %s61
      %p65 = pneg %p59
      %p66 = scmp.eq.s32.totalorder %s12, 1
      %p67 = por %p65, %p66
      %p68 = scmp.ne.s32.totalorder %s60, %s63
      %p69 = scmp.eq.s32.totalorder %s12, 0
      %p70 = por %p68, %p69
      %p71 = scmp.ne.s32.totalorder %s60, %s63
      %p72 = scmp.eq.s32.totalorder %s17, 1
      %p73 = por %p71, %p72
      %p74 = scmp.ne.s32.totalorder %s63, %s64
      %p75 = scmp.eq.s32.totalorder %s17, 0
      %p76 = por %p74, %p75
      %p77 = scmp.ne.s32.totalorder %s63, %s64
      %p78 = scmp.eq.s32.totalorder %s18, 1
      %p79 = por %p77, %p78
      %p81 = scmp.ne.s32.totalorder %s64, %s80
      %p82 = scmp.eq.s32.totalorder %s18, 0
      %p83 = por %p81, %p82
      %s84 = ssub.s32 %s20, %s27
      %p85 = scmp.eq.s32.totalorder %s84, 0
      %s87 = sadd.s32 %s86, 1
      %s88 = scalar_select %p85, %s86, %s87
      %p91 = pneg %p85
      %p92 = scmp.eq.s32.totalorder %s12, 1
      %p93 = por %p91, %p92
      %p94 = scmp.ne.s32.totalorder %s86, %s89
      %p95 = scmp.eq.s32.totalorder %s12, 0
      %p96 = por %p94, %p95
      %p97 = scmp.ne.s32.totalorder %s86, %s89
      %p98 = scmp.eq.s32.totalorder %s17, 1
      %p99 = por %p97, %p98
      %p100 = scmp.ne.s32.totalorder %s89, %s90
      %p101 = scmp.eq.s32.totalorder %s17, 0
      %p102 = por %p100, %p101
      %p103 = scmp.ne.s32.totalorder %s89, %s90
      %p104 = scmp.eq.s32.totalorder %s18, 1
      %p105 = por %p103, %p104
      %p107 = scmp.ne.s32.totalorder %s90, %s106
      %p108 = scmp.eq.s32.totalorder %s18, 0
      %p109 = por %p107, %p108
      %s110 = ssub.s32 %s19, %s31
      %s111 = ssub.s32 %s20, %s27
      %s112 = sor.u32 %s110, %s111
      %p113 = scmp.eq.s32.totalorder %s112, 0
      %s115 = sadd.s32 %s114, 1
      %s116 = scalar_select %p113, %s114, %s115
      %p119 = pneg %p113
      %p120 = scmp.eq.s32.totalorder %s12, 1
      %p121 = por %p119, %p120
      %p122 = scmp.ne.s32.totalorder %s114, %s117
      %p123 = scmp.eq.s32.totalorder %s12, 0
      %p124 = por %p122, %p123
      %p125 = scmp.ne.s32.totalorder %s114, %s117
      %p126 = scmp.eq.s32.totalorder %s17, 1
      %p127 = por %p125, %p126
      %p128 = scmp.ne.s32.totalorder %s117, %s118
      %p129 = scmp.eq.s32.totalorder %s17, 0
      %p130 = por %p128, %p129
      %p131 = scmp.ne.s32.totalorder %s117, %s118
      %p132 = scmp.eq.s32.totalorder %s18, 1
      %p133 = por %p131, %p132
      %p135 = scmp.ne.s32.totalorder %s118, %s134
      %p136 = scmp.eq.s32.totalorder %s18, 0
      %p137 = por %p135, %p136
      %p138 = scmp.le.s32.totalorder 1, %s12
      %p139 = scmp.lt.s32.totalorder %s12, 3
      %p140 = pnand %p138, %p139
      %p141 = pneg %p140
      // Predicated region
      $region9: #{fully_connected_block.1} parent=5 // pred_check
        _
      $region10: #{fully_connected_block.1} parent=5 // pred_check_branch
        %143 = sbr.rel (%p140) target = $region12
      $region11: #{fully_connected_block.1} parent=5 // pred_region
        %s144 = ssub.s32 %s12, 1
        // Predicated region
        $region13: #{fully_connected_block.1} parent=11 // pred_check
          %p145 = pneg %p76
        $region14: #{fully_connected_block.1} parent=11 // pred_check_branch
          %147 = sbr.rel (%p145) target = $region16
        $region15: #{fully_connected_block.1} parent=11 // pred_region
          %s148 = smul.u32 8, %s22
          %p149 = scmp.lt.s32.totalorder %s148, 7
          %s150 = scalar_select %p149, %s148, 7
          %s151 = smul.addr %s150, 8
          %s152 = scalar_lea.vmem %s1, %s151
          %s153 = smul.u32 8, %s22
        $region16: #{fully_connected_block.1} parent=11 // pred_fallthru
          _
        // Predicated region
        $region17: #{fully_connected_block.1} parent=11 // pred_check
          %p154 = pneg %p102
        $region18: #{fully_connected_block.1} parent=11 // pred_check_branch
          %156 = sbr.rel (%p154) target = $region20
        $region19: #{fully_connected_block.1} parent=11 // pred_region
          %p157 = scmp.lt.s32.totalorder %s22, 0
          %s158 = scalar_select %p157, %s22, 0
          %s159 = scalar_lea.vmem %s2, %s158
        $region20: #{fully_connected_block.1} parent=11 // pred_fallthru
          _
      $region12: #{fully_connected_block.1} parent=5 // pred_fallthru
        _
      %p160 = scmp.lt.s32.totalorder %s12, 2
      // Predicated region
      $region21: #{fully_connected_block.1} parent=5 // pred_check
        %p161 = pneg %p160
      $region22: #{fully_connected_block.1} parent=5 // pred_check_branch
        %163 = sbr.rel (%p161) target = $region24
      $region23: #{fully_connected_block.1} parent=5 // pred_region
        // Predicated region
        $region25: #{fully_connected_block.1} parent=23 // pred_check
          %p164 = pneg %p44
        $region26: #{fully_connected_block.1} parent=23 // pred_check_branch
          %166 = sbr.rel (%p164) target = $region28
        $region27: #{fully_connected_block.1} parent=23 // pred_region
          %p167 = scmp.lt.s32.totalorder %s19, 1
          %s168 = scalar_select %p167, %s19, 1
          %s169 = smul.addr %s168, 8
          %s170 = scalar_lea.vmem %s0, %s169
        $region28: #{fully_connected_block.1} parent=23 // pred_fallthru
          _
      $region24: #{fully_connected_block.1} parent=5 // pred_fallthru
        _
      %p171 = scmp.le.s32.totalorder 1, %s12
      %p172 = scmp.lt.s32.totalorder %s12, 3
      %p173 = pnand %p171, %p172
      %p174 = pneg %p173
      // Predicated region
      $region29: #{fully_connected_block.1} parent=5 // pred_check
        _
      $region30: #{fully_connected_block.1} parent=5 // pred_check_branch
        %176 = sbr.rel (%p173) target = $region32
      $region31: #{fully_connected_block.1} parent=5 // pred_region
        %s177 = ssub.s32 %s12, 1
        %p178 = scmp.lt.s32.totalorder %s21, 1
        %s179 = scalar_select %p178, %s21, 1
        %s180 = smul.addr %s179, 8
        %s181 = scalar_lea.vmem %s0, %s180
        %p182 = pneg %p50
        %p183 = pneg %p47
        %s184 = smul.u32 8, %s22
        %p185 = scmp.lt.s32.totalorder %s184, 7
        %s186 = scalar_select %p185, %s184, 7
        %s187 = smul.addr %s186, 8
        %s188 = scalar_lea.vmem %s1, %s187
        %p189 = pneg %p76
        %p190 = pneg %p73
        %p191 = scmp.lt.s32.totalorder %s22, 0
        %s192 = scalar_select %p191, %s22, 0
        %s193 = scalar_lea.vmem %s2, %s192
        %p194 = pneg %p102
        %p195 = pneg %p99
        %p196 = pneg %p130
        %p197 = pneg %p127
        %s198 = sand.u32 %s117, 1
        %s199 = scalar_lea.sflag [#allocation3], %s198
        %s200 = sand.u32 %s117, 1
        %s201 = smul.addr %s200, 8
        %s202 = scalar_lea.vmem [#allocation2], %s201
        %p203 = scmp.lt.s32.totalorder %s21, 1
        %s204 = scalar_select %p203, %s21, 1
        %s205 = smul.addr %s204, 8
        %s206 = scalar_lea.vmem %s0, %s205
        %s207 = smul.u32 8, %s22
        %p208 = scmp.lt.s32.totalorder %s207, 7
        %s209 = scalar_select %p208, %s207, 7
        %s210 = smul.addr %s209, 8
        %s211 = scalar_lea.vmem %s1, %s210
        %s212 = smul.u32 8, %s22
        %p213 = scmp.lt.s32.totalorder %s22, 0
        %s214 = scalar_select %p213, %s22, 0
        %s215 = scalar_lea.vmem %s2, %s214
        %v216 = vld [vmem:[%s206] sm:$0xff]
        %v217 = vld [vmem:[%s211] sm:$0xff]
        %v218 = vld [vmem:[%s211 + $0x8] sm:$0xff]
        %v219 = vld [vmem:[%s211 + $0x10] sm:$0xff]
        %v220 = vld [vmem:[%s211 + $0x18] sm:$0xff]
        %v221 = vld [vmem:[%s211 + $0x20] sm:$0xff]
        %v222 = vld [vmem:[%s211 + $0x28] sm:$0xff]
        %v223 = vld [vmem:[%s211 + $0x30] sm:$0xff]
        %v224 = vld [vmem:[%s211 + $0x38] sm:$0xff]
        %v225 = vld [vmem:[%s215] sm:$0x1]
        %v227 = vperm.slane %v225, 0
        %vm229 = vcmask 261120
        %v231 = vsel %vm229, %v216, 0
        %v234 = vsel %vm229, %v217, 0
        %v237 = vsel %vm229, %v218, 0
        %v240 = vsel %vm229, %v219, 0
        %v243 = vsel %vm229, %v220, 0
        %v246 = vsel %vm229, %v221, 0
        %v249 = vsel %vm229, %v222, 0
        %v252 = vsel %vm229, %v223, 0
        %v255 = vsel %vm229, %v224, 0
        %257 = vmatpush.xpose.msra.mxu0 0.0
        %258 = vmatpush.xpose.msra.mxu0 0.0
        %259 = vmatpush.xpose.msra.mxu0 0.0
        %260 = vmatpush.xpose.msra.mxu0 0.0
        %261 = vmatpush.xpose.msra.mxu0 0.0
        %262 = vmatpush.xpose.msra.mxu0 0.0
        %263 = vmatpush.xpose.msra.mxu0 0.0
        %264 = vmatpush.xpose.msra.mxu0 0.0
        %265 = vmatpush.xpose.msra.mxu0 %v255
        %266 = vmatpush.xpose.msra.mxu0 %v252
        %267 = vmatpush.xpose.msra.mxu0 %v249
        %268 = vmatpush.xpose.msra.mxu0 %v246
        %269 = vmatpush.xpose.msra.mxu0 %v243
        %270 = vmatpush.xpose.msra.mxu0 %v240
        %271 = vmatpush.xpose.msra.mxu0 %v237
        %272 = vmatpush.xpose.msra.mxu0 %v234
        %273 = vmatmul.f32.gmra.mxu0 %v231
        %v274 = vpop.f32.mrf.mxu0
        %v275 = vadd.f32 %v227, %v274
        %276 = vdwg.mxu0
        %v277 = vmax.f32 %v275, 0.0
        %vm278 = vcmask 523264
        %279 = vst.msk [vmem:[%s202] sm:$0xff] %vm278, %v277
        %s280 = sand.u32 %s117, 1
        %s281 = scalar_lea.sflag [#allocation3], %s280
        %s282 = sand.u32 %s117, 1
        %s283 = smul.addr %s282, 8
        %s284 = scalar_lea.vmem [#allocation2], %s283
        // Predicated region
        $region33: #{fully_connected_block.1} parent=31 // pred_check
          %p285 = pneg %p127
        $region34: #{fully_connected_block.1} parent=31 // pred_check_branch
          %287 = sbr.rel (%p285) target = $region36
        $region35: #{fully_connected_block.1} parent=31 // pred_region
          %289 = vsyncadd %s281, 0
          %s290 = sadd.s32 %s22, %s21
          %s291 = smul.addr %s290, 8
          %s292 = scalar_lea.hbm %s3, %s291
          %s294 = sshll.u32 %s284, 4
          %s295 = int_to_ptr.vmem [resolvable:$true] %s294
          %s296 = sshll.u32 %s292, 4
          %s297 = int_to_ptr.hbm [resolvable:$true] %s296
          %299 = dma.vmem_to_hbm [thread:$0]  %s295, 128, %s297, %s281
        $region36: #{fully_connected_block.1} parent=31 // pred_fallthru
          _
      $region32: #{fully_connected_block.1} parent=5 // pred_fallthru
        _
      %p300 = scmp.le.s32.totalorder 2, %s12
      // Predicated region
      $region37: #{fully_connected_block.1} parent=5 // pred_check
        %p301 = pneg %p300
      $region38: #{fully_connected_block.1} parent=5 // pred_check_branch
        %303 = sbr.rel (%p301) target = $region40
      $region39: #{fully_connected_block.1} parent=5 // pred_region
        %s304 = ssub.s32 %s12, 2
        // Predicated region
        $region41: #{fully_connected_block.1} parent=39 // pred_check
          %p305 = pneg %p133
        $region42: #{fully_connected_block.1} parent=39 // pred_check_branch
          %307 = sbr.rel (%p305) target = $region44
        $region43: #{fully_connected_block.1} parent=39 // pred_region
          %s308 = sand.u32 %s118, 1
          %s309 = scalar_lea.sflag [#allocation3], %s308
          %s310 = sand.u32 %s118, 1
          %s311 = smul.addr %s310, 8
          %s312 = scalar_lea.vmem [#allocation2], %s311
          %314 = dma.done %s309, 128
        $region44: #{fully_connected_block.1} parent=39 // pred_fallthru
          _
      $region40: #{fully_connected_block.1} parent=5 // pred_fallthru
        _
    $region6: #{fully_connected_block.1} parent=1 // loop_footer
      %s16 = sadd.s32 1, %s12
    $region7: #{fully_connected_block.1} parent=1 // loop_footer_branch
      %11 = sbr.rel target = $region3
    $region8: #{fully_connected_block.1} parent=1 // loop_exit
      _
    %315 = vsyncpa [#allocation3], 1
    %s316 = scalar_lea.sflag [#allocation3], 1
    %317 = vsyncpa %s316, 1

</llo_original>
